<compile_context>
chip_gen: v6e
topology: v6e:2x2x1
jax: 0.10.0
libtpu: 0.0.40
codegen_flags: <defaults>
</compile_context>

<pallas_src>
import functools

import jax
import jax.numpy as jnp
from jax.experimental import pallas as pl
from jax.experimental.pallas import tpu as pltpu


def _round_up(x, m):
    return (x + m - 1) // m * m


def _adapt_conv_kernel(x_ref, ew_ref, w_ref, b_ref, o_ref, h_scr, nh_scr, *, is_last):
    t = pl.program_id(1)
    tile_m = o_ref.shape[1]

    # Once per batch element (row-tile 0): full linear + normalize into VMEM scratch.
    @pl.when(t == 0)
    def _():
        x = x_ref[0]                                    # (N_pad, Din_pad) f32
        w = w_ref[...]                                  # (Din_pad, D_pad) f32
        b = b_ref[...]                                  # (1, D_pad) f32
        h = jnp.dot(x, w, preferred_element_type=jnp.float32) + b
        # F.normalize(h, p=2, dim=-1) via rsqrt on the EUP (clamp sum-of-squares).
        sumsq = jnp.sum(h * h, axis=-1, keepdims=True)
        inv = jax.lax.rsqrt(jnp.maximum(sumsq, 1e-24))
        h_scr[...] = h.astype(h_scr.dtype)
        nh_scr[...] = (h * inv).astype(nh_scr.dtype)

    row = pl.multiple_of(t * tile_m, tile_m)
    nh_tile = nh_scr[pl.ds(row, tile_m), :]             # (TILE_M, D_pad) bf16

    # cos_tile = nh_tile @ nh_full^T  (bf16 inputs, f32 accumulation on the MXU)
    cos = jax.lax.dot_general(
        nh_tile, nh_scr[...], (((1,), (1,)), ((), ())),
        preferred_element_type=jnp.float32)             # (TILE_M, N_pad) f32

    ew = ew_ref[0].astype(jnp.float32)                  # (TILE_M, N_pad) f32
    a = (ew * cos).astype(jnp.bfloat16)

    out = jnp.dot(a, h_scr[...], preferred_element_type=jnp.float32)   # (TILE_M, D_pad)
    if not is_last:
        out = jnp.maximum(out, 0.0)   # ReLU; dropout p=0.0 -> identity
        # TODO(synk): dropout with p>0 in training mode would need pltpu.prng_* RNG.
    o_ref[0] = out.astype(o_ref.dtype)


def adapt_conv_padded(x_p, ew_p, w_p, b_p, *, is_last, tile_m=128):
    """One AdaptConv layer on pre-padded inputs.

    x_p : (B, N_pad, Din_pad) f32  (padded feature lanes / node rows are zero)
    ew_p: (B, N_pad, N_pad)  bf16  (padded rows/cols are zero)
    w_p : (Din_pad, D_pad)   f32   (padded rows/cols are zero)
    b_p : (1, D_pad)         f32   (padded lanes are zero)
    returns (B, N_pad, D_pad) f32 with padded rows/lanes still zero.
    """
    B, N_pad, Din_pad = x_p.shape
    D_pad = w_p.shape[1]
    assert tile_m % 128 == 0 and N_pad % tile_m == 0
    num_tiles = N_pad // tile_m

    # VMEM budget for the chosen tiles (double-buffered blocks + scratch) with headroom.
    vmem_bytes = (
        2 * N_pad * Din_pad * 4              # x block (resident across the t axis)
        + 2 * tile_m * N_pad * 2             # streamed ew tile (bf16)
        + 2 * tile_m * D_pad * 4             # out tile
        + 2 * (Din_pad * D_pad + D_pad) * 4  # weights / bias
        + 2 * N_pad * D_pad * 2              # h / nh scratch (bf16)
        + N_pad * D_pad * 4                  # f32 temporaries for the t==0 linear
    )
    vmem_limit = int(min(max(vmem_bytes + (8 << 20), 32 << 20), 64 << 20))

    kernel = functools.partial(_adapt_conv_kernel, is_last=is_last)
    return pl.pallas_call(
        kernel,
        out_shape=jax.ShapeDtypeStruct((B, N_pad, D_pad), jnp.float32),
        grid_spec=pltpu.PrefetchScalarGridSpec(
            num_scalar_prefetch=0,
            grid=(B, num_tiles),
            in_specs=[
                # full x for this batch element, kept resident across the row-tile axis
                pl.BlockSpec((1, N_pad, Din_pad), lambda b, t: (b, 0, 0)),
                # streamed edge-weight row tile (pipelined against the matmuls)
                pl.BlockSpec((1, tile_m, N_pad), lambda b, t: (b, t, 0)),
                pl.BlockSpec((Din_pad, D_pad), lambda b, t: (0, 0)),
                pl.BlockSpec((1, D_pad), lambda b, t: (0, 0)),
            ],
            out_specs=pl.BlockSpec((1, tile_m, D_pad), lambda b, t: (b, t, 0)),
            scratch_shapes=[
                pltpu.VMEM((N_pad, D_pad), jnp.bfloat16),   # h_full
                pltpu.VMEM((N_pad, D_pad), jnp.bfloat16),   # nh_full
            ],
        ),
        compiler_params=pltpu.CompilerParams(
            # The row-tile axis must stay "arbitrary": the t==0 scratch init has to run
            # on the same core as the tiles that consume it. Batch axis is parallel.
            dimension_semantics=("parallel", "arbitrary"),
            vmem_limit_bytes=vmem_limit,
        ),
    )(x_p, ew_p, w_p, b_p)


def init_adapt_gnn_params(key, input_dim, hidden_dim, num_layers):
    """Deterministic nn.Linear-style init: U(-1/sqrt(fan_in), 1/sqrt(fan_in))."""
    params = []
    for i in range(num_layers):
        in_dim = input_dim if i == 0 else hidden_dim
        key, kw, kb = jax.random.split(key, 3)
        bound = 1.0 / (in_dim ** 0.5)
        # stored as (in_dim, out_dim) = W^T so the kernel does x @ W
        w = jax.random.uniform(kw, (in_dim, hidden_dim), jnp.float32, -bound, bound)
        b = jax.random.uniform(kb, (1, hidden_dim), jnp.float32, -bound, bound)
        params.append((w, b))
    return params


def adapt_gnn(x, edge_weight, params, *, tile_m=128):
    B, N, in_dim = x.shape
    hidden_dim = params[0][0].shape[1]
    num_layers = len(params)

    N_pad = _round_up(N, tile_m)
    Din_pad = _round_up(in_dim, 128)
    D_pad = _round_up(hidden_dim, 128)

    # Pad nodes + features once. Zero padding keeps the math exact: padded feature
    # lanes are zero (do not perturb norms / cos) and padded edge_weight rows/cols
    # are zero (padded nodes never contribute to real outputs).
    x_p = jnp.pad(x, ((0, 0), (0, N_pad - N), (0, Din_pad - in_dim)))
    ew_p = jnp.pad(edge_weight,
                   ((0, 0), (0, N_pad - N), (0, N_pad - N))).astype(jnp.bfloat16)

    # TODO(synk): fusing all layers into one pallas_call would save the intermediate
    # activation round-trips, but once node-tiled the edge_weight stream must be
    # re-read per layer anyway (layer l+1 needs all of layer l's nodes), so the
    # per-layer pallas_call structure is kept.
    for i, (w, b) in enumerate(params):
        in_pad = x_p.shape[-1]
        w_p = jnp.pad(w, ((0, in_pad - w.shape[0]), (0, D_pad - w.shape[1])))
        b_p = jnp.pad(b, ((0, 0), (0, D_pad - b.shape[1])))
        x_p = adapt_conv_padded(x_p, ew_p, w_p, b_p,
                                is_last=(i == num_layers - 1), tile_m=tile_m)
    return x_p[:, :N, :hidden_dim]


def adapt_gnn_ref(x, edge_weight, params, *, match_kernel_precision=False):
    """Pure-JAX reference mirroring the PyTorch forward.

    match_kernel_precision=True applies the same bf16-input / f32-accumulate matmul
    casts as the kernel (for a tight check); False is the plain f32 reference.
    """
    num_layers = len(params)
    if match_kernel_precision:
        ew_f = edge_weight.astype(jnp.bfloat16).astype(jnp.float32)
    for i, (w, b) in enumerate(params):
        h = jnp.einsum('bnd,dc->bnc', x, w,
                       precision=jax.lax.Precision.HIGHEST) + b[None]
        if match_kernel_precision:
            nh = h * jax.lax.rsqrt(jnp.maximum(jnp.sum(h * h, -1, keepdims=True),
                                               1e-24))
            nh16 = nh.astype(jnp.bfloat16)
            cos = jnp.einsum('bij,bkj->bik', nh16, nh16,
                             preferred_element_type=jnp.float32)
            a = (ew_f * cos).astype(jnp.bfloat16)
            out = jnp.einsum('bpq,bqc->bpc', a, h.astype(jnp.bfloat16),
                             preferred_element_type=jnp.float32)
        else:
            norm = jnp.sqrt(jnp.sum(h * h, -1, keepdims=True))
            nh = h / jnp.maximum(norm, 1e-12)
            cos = jnp.einsum('bij,bkj->bik', nh, nh,
                             precision=jax.lax.Precision.HIGHEST)
            out = jnp.einsum('bpq,bqc->bpc', edge_weight * cos, h,
                             precision=jax.lax.Precision.HIGHEST)
        if i != num_layers - 1:
            out = jax.nn.relu(out)
        x = out
    return x


if __name__ == "__main__":
    B, N = 2, 16          # batch of graphs, nodes per graph
    input_dim, hidden_dim = 16, 32
    num_layers = 3

    key = jax.random.PRNGKey(0)
    kx, ke, kp = jax.random.split(key, 3)
    x = jax.random.normal(kx, (B, N, input_dim), jnp.float32)
    edge_weight = jax.random.uniform(ke, (B, N, N), jnp.float32)
    params = init_adapt_gnn_params(kp, input_dim, hidden_dim, num_layers)

    out = adapt_gnn(x, edge_weight, params)
    out = jax.block_until_ready(out)
    assert out.shape == (B, N, hidden_dim)

    # Tight check vs a reference using the same bf16-in / f32-acc matmul precision,
    # plus a loose global check vs the pure f32 reference.
    ref_matched = adapt_gnn_ref(x, edge_weight, params, match_kernel_precision=True)
    ref_f32 = adapt_gnn_ref(x, edge_weight, params, match_kernel_precision=False)
    assert jnp.allclose(out, ref_matched, atol=1e-2, rtol=1e-2), \
        "mismatch vs matched-precision reference"
    rel = jnp.linalg.norm(out - ref_f32) / jnp.maximum(jnp.linalg.norm(ref_f32), 1e-12)
    assert rel < 0.1, f"bf16 kernel too far from f32 reference: rel={rel}"

    print("KERNEL_OK")
</pallas_src>

<mosaic_0001>
module attributes {stable_mosaic.version = 11 : i64} {
  func.func @_adapt_conv_kernel(%arg0: i32, %arg1: i32, %arg2: memref<1x128x128xf32, #tpu.memory_space<vmem>>, %arg3: memref<1x128x128xbf16, #tpu.memory_space<vmem>>, %arg4: memref<128x128xf32, #tpu.memory_space<vmem>>, %arg5: memref<1x128xf32, #tpu.memory_space<vmem>>, %arg6: memref<1x128x128xf32, #tpu.memory_space<vmem>>, %arg7: memref<128x128xbf16, #tpu.memory_space<vmem>>, %arg8: memref<128x128xbf16, #tpu.memory_space<vmem>>) attributes {dimension_semantics = [#tpu.dimension_semantics<parallel>, #tpu.dimension_semantics<arbitrary>], iteration_bounds = array<i64: 2, 1>, scalar_prefetch = 0 : i64, scratch_operands = 2 : i64, tpu.core_type = #tpu.core_type<tc>, window_params = [{transform_indices = @transform_0, window_bounds = array<i64: 1, 128, 128>}, {transform_indices = @transform_1, window_bounds = array<i64: 1, 128, 128>}, {pipeline_mode = #tpu.pipeline_mode<synchronous>, transform_indices = @transform_2, window_bounds = array<i64: 128, 128>}, {pipeline_mode = #tpu.pipeline_mode<synchronous>, transform_indices = @transform_3, window_bounds = array<i64: 1, 128>}, {transform_indices = @transform_4, window_bounds = array<i64: 1, 128, 128>}]} {
    %c0_i32 = arith.constant 0 : i32
    %0 = arith.cmpi eq, %arg1, %c0_i32 : i32
    %1 = arith.extui %0 : i1 to i32
    %c0_i32_0 = arith.constant 0 : i32
    %2 = arith.cmpi ne, %1, %c0_i32_0 : i32
    scf.if %2 {
      %c0_13 = arith.constant 0 : index
      %c0_14 = arith.constant 0 : index
      %c0_15 = arith.constant 0 : index
      %21 = vector.load %arg2[%c0_13, %c0_14, %c0_15] : memref<1x128x128xf32, #tpu.memory_space<vmem>>, vector<1x128x128xf32>
      %22 = vector.shape_cast %21 : vector<1x128x128xf32> to vector<128x128xf32>
      %c0_16 = arith.constant 0 : index
      %c0_17 = arith.constant 0 : index
      %23 = vector.load %arg4[%c0_16, %c0_17] : memref<128x128xf32, #tpu.memory_space<vmem>>, vector<128x128xf32>
      %c0_18 = arith.constant 0 : index
      %c0_19 = arith.constant 0 : index
      %24 = vector.load %arg5[%c0_18, %c0_19] : memref<1x128xf32, #tpu.memory_space<vmem>>, vector<1x128xf32>
      %cst_20 = arith.constant dense<0.000000e+00> : vector<128x128xf32>
      %25 = tpu.matmul %22, %23, %cst_20 {dimension_numbers = #tpu.dot_dimension_numbers<[1], [0], [0], [1], [0, 0, 1, 1], [], []>} : vector<128x128xf32>, vector<128x128xf32>, vector<128x128xf32> -> vector<128x128xf32>
      %26 = vector.broadcast %24 : vector<1x128xf32> to vector<128x128xf32>
      %27 = arith.addf %25, %26 : vector<128x128xf32>
      %28 = arith.mulf %27, %27 : vector<128x128xf32>
      %cst_21 = arith.constant dense<0.000000e+00> : vector<128xf32>
      %29 = vector.multi_reduction <add>, %28, %cst_21 [1] : vector<128x128xf32> to vector<128xf32>
      %30 = vector.shape_cast %29 : vector<128xf32> to vector<128x1xf32>
      %cst_22 = arith.constant 1.000000e-24 : f32
      %31 = vector.broadcast %cst_22 : f32 to vector<128x1xf32>
      %32 = arith.maximumf %30, %31 : vector<128x1xf32>
      %33 = math.rsqrt %32 : vector<128x1xf32>
      %34 = arith.truncf %27 : vector<128x128xf32> to vector<128x128xbf16>
      %c0_23 = arith.constant 0 : index
      %c0_24 = arith.constant 0 : index
      %35 = vector.load %arg7[%c0_23, %c0_24] : memref<128x128xbf16, #tpu.memory_space<vmem>>, vector<128x128xbf16>
      tpu.vector_store %arg7[%c0_23, %c0_24], %34 {strides = array<i32>} : memref<128x128xbf16, #tpu.memory_space<vmem>>, vector<128x128xbf16>,
      %36 = vector.broadcast %33 : vector<128x1xf32> to vector<128x128xf32>
      %37 = arith.mulf %27, %36 : vector<128x128xf32>
      %38 = arith.truncf %37 : vector<128x128xf32> to vector<128x128xbf16>
      %c0_25 = arith.constant 0 : index
      %c0_26 = arith.constant 0 : index
      %39 = vector.load %arg8[%c0_25, %c0_26] : memref<128x128xbf16, #tpu.memory_space<vmem>>, vector<128x128xbf16>
      tpu.vector_store %arg8[%c0_25, %c0_26], %38 {strides = array<i32>} : memref<128x128xbf16, #tpu.memory_space<vmem>>, vector<128x128xbf16>,
    } else {
    }
    %c128_i32 = arith.constant 128 : i32
    %3 = arith.muli %arg1, %c128_i32 : i32
    %4 = tpu.assume_multiple %3, 128 : i32
    %5 = arith.index_cast %4 : i32 to index
    %c0 = arith.constant 0 : index
    %6 = vector.load %arg8[%5, %c0] : memref<128x128xbf16, #tpu.memory_space<vmem>>, vector<128x128xbf16>
    %c0_1 = arith.constant 0 : index
    %c0_2 = arith.constant 0 : index
    %7 = vector.load %arg8[%c0_1, %c0_2] : memref<128x128xbf16, #tpu.memory_space<vmem>>, vector<128x128xbf16>
    %cst = arith.constant dense<0.000000e+00> : vector<128x128xf32>
    %8 = tpu.matmul %6, %7, %cst {dimension_numbers = #tpu.dot_dimension_numbers<[1], [1], [0], [0], [0, 0, 1, 0], [], []>} : vector<128x128xbf16>, vector<128x128xbf16>, vector<128x128xf32> -> vector<128x128xf32>
    %c0_3 = arith.constant 0 : index
    %c0_4 = arith.constant 0 : index
    %c0_5 = arith.constant 0 : index
    %9 = vector.load %arg3[%c0_3, %c0_4, %c0_5] : memref<1x128x128xbf16, #tpu.memory_space<vmem>>, vector<1x128x128xbf16>
    %10 = vector.shape_cast %9 : vector<1x128x128xbf16> to vector<128x128xbf16>
    %11 = arith.extf %10 : vector<128x128xbf16> to vector<128x128xf32>
    %12 = arith.mulf %11, %8 : vector<128x128xf32>
    %13 = arith.truncf %12 : vector<128x128xf32> to vector<128x128xbf16>
    %c0_6 = arith.constant 0 : index
    %c0_7 = arith.constant 0 : index
    %14 = vector.load %arg7[%c0_6, %c0_7] : memref<128x128xbf16, #tpu.memory_space<vmem>>, vector<128x128xbf16>
    %cst_8 = arith.constant dense<0.000000e+00> : vector<128x128xf32>
    %15 = tpu.matmul %13, %14, %cst_8 {dimension_numbers = #tpu.dot_dimension_numbers<[1], [0], [0], [1], [0, 0, 1, 1], [], []>} : vector<128x128xbf16>, vector<128x128xbf16>, vector<128x128xf32> -> vector<128x128xf32>
    %cst_9 = arith.constant 0.000000e+00 : f32
    %16 = vector.broadcast %cst_9 : f32 to vector<128x128xf32>
    %17 = arith.maximumf %15, %16 : vector<128x128xf32>
    %c0_10 = arith.constant 0 : index
    %c0_11 = arith.constant 0 : index
    %c0_12 = arith.constant 0 : index
    %18 = vector.load %arg6[%c0_10, %c0_11, %c0_12] : memref<1x128x128xf32, #tpu.memory_space<vmem>>, vector<1x128x128xf32>
    %19 = vector.shape_cast %18 : vector<1x128x128xf32> to vector<128x128xf32>
    %20 = vector.shape_cast %17 : vector<128x128xf32> to vector<1x128x128xf32>
    tpu.vector_store %arg6[%c0_10, %c0_11, %c0_12], %20 {strides = array<i32>} : memref<1x128x128xf32, #tpu.memory_space<vmem>>, vector<1x128x128xf32>,
    return
  }
  func.func @transform_0(%arg0: i32, %arg1: i32) -> (i32, i32, i32) {
    %c0_i32 = arith.constant 0 : i32
    %c0_i32_0 = arith.constant 0 : i32
    %c0_i32_1 = arith.constant 0 : i32
    return %arg0, %c0_i32, %c0_i32_0 : i32, i32, i32
  }
  func.func @transform_1(%arg0: i32, %arg1: i32) -> (i32, i32, i32) {
    %c0_i32 = arith.constant 0 : i32
    %c0_i32_0 = arith.constant 0 : i32
    return %arg0, %arg1, %c0_i32 : i32, i32, i32
  }
  func.func @transform_2(%arg0: i32, %arg1: i32) -> (i32, i32) {
    %c0_i32 = arith.constant 0 : i32
    %c0_i32_0 = arith.constant 0 : i32
    %c0_i32_1 = arith.constant 0 : i32
    return %c0_i32, %c0_i32_0 : i32, i32
  }
  func.func @transform_3(%arg0: i32, %arg1: i32) -> (i32, i32) {
    %c0_i32 = arith.constant 0 : i32
    %c0_i32_0 = arith.constant 0 : i32
    %c0_i32_1 = arith.constant 0 : i32
    return %c0_i32, %c0_i32_0 : i32, i32
  }
  func.func @transform_4(%arg0: i32, %arg1: i32) -> (i32, i32, i32) {
    %c0_i32 = arith.constant 0 : i32
    %c0_i32_0 = arith.constant 0 : i32
    return %arg0, %arg1, %c0_i32 : i32, i32, i32
  }
}

</mosaic_0001>

<llo_original>
// kernel: tpu_custom_call.1
$region0: #{tpu_custom_call.1}
  #allocation0 [shape = 'u32[]', space=smem, size = 0x4, offset = 0x4, fixed_abs, tag = 'smem constant byte address 0x4 - core index']
  #allocation1 [shape = 'u32[144,128]{1,0:T(1,128)}', space=vmem, size = 0x12000, scoped, tag = 'internal scratch']
  #allocation2 [shape = 'bf16[128,128]{1,0:T(8,128)(2,1)}', space=vmem, size = 0x8000, scoped, tag = 'scratch operand']
  #allocation3 [shape = 'bf16[128,128]{1,0:T(8,128)(2,1)}', space=vmem, size = 0x8000, scoped, tag = 'scratch operand']
  %s0 = inlined_call_operand.hbm [shape: f32[2,128,128], index: 0, kind: input, shape index: {}]
  %s1 = inlined_call_operand.hbm [shape: bf16[2,128,128], index: 1, kind: input, shape index: {}]
  %s2 = inlined_call_operand.hbm [shape: f32[128,128], index: 2, kind: input, shape index: {}]
  %s3 = inlined_call_operand.vmem [shape: f32[1,128], index: 3, kind: input, shape index: {}]
  %s4 = inlined_call_operand.hbm [shape: f32[2,128,128], index: 4, kind: output, shape index: {}]
  %s5 = sld [smem:[#allocation0]]
  $region65: #{tpu_custom_call.1} parent=0
    _
  %s7 = ssub.s32 1, %s5
  %s8 = scalar_select 0, %s7, %s5
  $region1: #{tpu_custom_call.1} parent=0
    #allocation4 [shape = 'u8[131072]{0}', space=vmem, size = 0x20000, scoped, tag = 'input window, operand 0']
    #allocation5 [shape = 's32[2]{0}', space=sflag, size = 0x8, scoped, tag = 'scoped memory for tpu_custom_call.1']
    #allocation6 [shape = 's32[2]{0}', space=sflag, size = 0x8, scoped, tag = 'scoped memory for tpu_custom_call.1']
    #allocation7 [shape = 'u8[65536]{0}', space=vmem, size = 0x10000, scoped, tag = 'input window, operand 1']
    #allocation8 [shape = 's32[2]{0}', space=sflag, size = 0x8, scoped, tag = 'scoped memory for tpu_custom_call.1']
    #allocation9 [shape = 'u8[65536]{0}', space=vmem, size = 0x10000, scoped, tag = 'input window, operand 2, single buffered']
    #allocation10 [shape = 'u8[131072]{0}', space=vmem, size = 0x20000, scoped, tag = 'output window, operand 0']
    %9 = vsyncpa [#allocation5], 0
    %s10 = scalar_lea.sflag [#allocation5], 1
    %11 = vsyncpa %s10, 0
    %12 = vsyncpa [#allocation8], 0
    %s13 = scalar_lea.sflag [#allocation8], 1
    %14 = vsyncpa %s13, 0
    %15 = vsyncpa [#allocation6], 0
    %s16 = scalar_lea.sflag [#allocation6], 1
    %17 = vsyncpa %s16, 0
    loop: start=0, step=1, limit=4
    $region2: #{tpu_custom_call.1} parent=1 // loop_pre_header
      _
    $region3: #{tpu_custom_call.1} parent=1 // loop_header
      %s19 = sphi 0, %s23
      %p20 = scmp.ge.s32.totalorder %s19, 4
      %s26 = sphi 0, %s38
      %s27 = sphi 0, %s34
      %s28 = sphi 0, %s26
      %s29 = sphi 0, %s27
      %s30 = sphi 0, %s28
      %s31 = sphi 0, %s29
      %s41 = sphi 0, %s43
      %s44 = sphi 0, %s41
      %s45 = sphi 0, %s44
      %s61 = sphi 0, %s45
      %s69 = sphi 0, %s71
      %s72 = sphi 0, %s69
      %s73 = sphi 0, %s72
      %s89 = sphi 0, %s73
      %s93 = sphi 0, %s93
      %s95 = sphi 0, %s93
      %s96 = sphi 0, %s95
      %s110 = sphi 0, %s96
      %s114 = sphi 0, %s114
      %s116 = sphi 0, %s114
      %s117 = sphi 0, %s116
      %s131 = sphi 0, %s117
      %s139 = sphi 0, %s141
      %s142 = sphi 0, %s139
      %s143 = sphi 0, %s142
      %s159 = sphi 0, %s143
    $region4: #{tpu_custom_call.1} parent=1 // loop_header_branch
      %22 = sbr.rel (%p20) target = $region8
    $region5: #{tpu_custom_call.1} parent=1 // loop_body
      %s24 = ssub.s32 %s19, 1
      %s25 = ssub.s32 %s19, 2
      %s32 = sadd.s32 1, %s27
      %p33 = scmp.ge.s32.totalorder %s32, 1
      %s34 = scalar_select %p33, 0, %s32
      %s35 = sadd.s32 1, %s26
      %s36 = scalar_select %p33, %s35, %s26
      %p37 = scmp.ge.s32.totalorder %s36, 2
      %s38 = scalar_select %p37, 0, %s36
      %s39 = ssub.s32 %s26, %s38
      %p40 = scmp.eq.s32.totalorder %s39, 0
      %s42 = sadd.s32 %s41, 1
      %s43 = scalar_select %p40, %s41, %s42
      %p46 = pneg %p40
      %p47 = scmp.eq.s32.totalorder %s19, 1
      %p48 = por %p46, %p47
      %p49 = scmp.ne.s32.totalorder %s41, %s44
      %p50 = scmp.eq.s32.totalorder %s19, 0
      %p51 = por %p49, %p50
      %p52 = scmp.ne.s32.totalorder %s41, %s44
      %p53 = scmp.eq.s32.totalorder %s24, 1
      %p54 = por %p52, %p53
      %p55 = scmp.ne.s32.totalorder %s44, %s45
      %p56 = scmp.eq.s32.totalorder %s24, 0
      %p57 = por %p55, %p56
      %p58 = scmp.ne.s32.totalorder %s44, %s45
      %p59 = scmp.eq.s32.totalorder %s25, 1
      %p60 = por %p58, %p59
      %p62 = scmp.ne.s32.totalorder %s45, %s61
      %p63 = scmp.eq.s32.totalorder %s25, 0
      %p64 = por %p62, %p63
      %s65 = ssub.s32 %s26, %s38
      %s66 = ssub.s32 %s27, %s34
      %s67 = sor.u32 %s65, %s66
      %p68 = scmp.eq.s32.totalorder %s67, 0
      %s70 = sadd.s32 %s69, 1
      %s71 = scalar_select %p68, %s69, %s70
      %p74 = pneg %p68
      %p75 = scmp.eq.s32.totalorder %s19, 1
      %p76 = por %p74, %p75
      %p77 = scmp.ne.s32.totalorder %s69, %s72
      %p78 = scmp.eq.s32.totalorder %s19, 0
      %p79 = por %p77, %p78
      %p80 = scmp.ne.s32.totalorder %s69, %s72
      %p81 = scmp.eq.s32.totalorder %s24, 1
      %p82 = por %p80, %p81
      %p83 = scmp.ne.s32.totalorder %s72, %s73
      %p84 = scmp.eq.s32.totalorder %s24, 0
      %p85 = por %p83, %p84
      %p86 = scmp.ne.s32.totalorder %s72, %s73
      %p87 = scmp.eq.s32.totalorder %s25, 1
      %p88 = por %p86, %p87
      %p90 = scmp.ne.s32.totalorder %s73, %s89
      %p91 = scmp.eq.s32.totalorder %s25, 0
      %p92 = por %p90, %p91
      %s94 = sadd.s32 %s93, 1
      %p97 = scmp.eq.s32.totalorder %s19, 1
      %p98 = scmp.ne.s32.totalorder %s93, %s95
      %p99 = scmp.eq.s32.totalorder %s19, 0
      %p100 = por %p98, %p99
      %p101 = scmp.ne.s32.totalorder %s93, %s95
      %p102 = scmp.eq.s32.totalorder %s24, 1
      %p103 = por %p101, %p102
      %p104 = scmp.ne.s32.totalorder %s95, %s96
      %p105 = scmp.eq.s32.totalorder %s24, 0
      %p106 = por %p104, %p105
      %p107 = scmp.ne.s32.totalorder %s95, %s96
      %p108 = scmp.eq.s32.totalorder %s25, 1
      %p109 = por %p107, %p108
      %p111 = scmp.ne.s32.totalorder %s96, %s110
      %p112 = scmp.eq.s32.totalorder %s25, 0
      %p113 = por %p111, %p112
      %s115 = sadd.s32 %s114, 1
      %p118 = scmp.eq.s32.totalorder %s19, 1
      %p119 = scmp.ne.s32.totalorder %s114, %s116
      %p120 = scmp.eq.s32.totalorder %s19, 0
      %p121 = por %p119, %p120
      %p122 = scmp.ne.s32.totalorder %s114, %s116
      %p123 = scmp.eq.s32.totalorder %s24, 1
      %p124 = por %p122, %p123
      %p125 = scmp.ne.s32.totalorder %s116, %s117
      %p126 = scmp.eq.s32.totalorder %s24, 0
      %p127 = por %p125, %p126
      %p128 = scmp.ne.s32.totalorder %s116, %s117
      %p129 = scmp.eq.s32.totalorder %s25, 1
      %p130 = por %p128, %p129
      %p132 = scmp.ne.s32.totalorder %s117, %s131
      %p133 = scmp.eq.s32.totalorder %s25, 0
      %p134 = por %p132, %p133
      %s135 = ssub.s32 %s26, %s38
      %s136 = ssub.s32 %s27, %s34
      %s137 = sor.u32 %s135, %s136
      %p138 = scmp.eq.s32.totalorder %s137, 0
      %s140 = sadd.s32 %s139, 1
      %s141 = scalar_select %p138, %s139, %s140
      %p144 = pneg %p138
      %p145 = scmp.eq.s32.totalorder %s19, 1
      %p146 = por %p144, %p145
      %p147 = scmp.ne.s32.totalorder %s139, %s142
      %p148 = scmp.eq.s32.totalorder %s19, 0
      %p149 = por %p147, %p148
      %p150 = scmp.ne.s32.totalorder %s139, %s142
      %p151 = scmp.eq.s32.totalorder %s24, 1
      %p152 = por %p150, %p151
      %p153 = scmp.ne.s32.totalorder %s142, %s143
      %p154 = scmp.eq.s32.totalorder %s24, 0
      %p155 = por %p153, %p154
      %p156 = scmp.ne.s32.totalorder %s142, %s143
      %p157 = scmp.eq.s32.totalorder %s25, 1
      %p158 = por %p156, %p157
      %p160 = scmp.ne.s32.totalorder %s143, %s159
      %p161 = scmp.eq.s32.totalorder %s25, 0
      %p162 = por %p160, %p161
      %p163 = scmp.le.s32.totalorder 1, %s19
      %p164 = scmp.lt.s32.totalorder %s19, 3
      %p165 = pnand %p163, %p164
      %p166 = pneg %p165
      // Predicated region
      $region9: #{tpu_custom_call.1} parent=5 // pred_check
        _
      $region10: #{tpu_custom_call.1} parent=5 // pred_check_branch
        %168 = sbr.rel (%p165) target = $region12
      $region11: #{tpu_custom_call.1} parent=5 // pred_region
        %s169 = ssub.s32 %s19, 1
        // Predicated region
        $region13: #{tpu_custom_call.1} parent=11 // pred_check
          %p170 = pneg %p106
        $region14: #{tpu_custom_call.1} parent=11 // pred_check_branch
          %172 = sbr.rel (%p170) target = $region16
        $region15: #{tpu_custom_call.1} parent=11 // pred_region
          %s174 = ssub.s32 2048, 2048
          %175 = vsyncadd [#allocation8], %s174
          %s176 = sshll.u32 [#allocation9], 4
          %s177 = int_to_ptr.vmem [resolvable:$true] %s176
          %182 = dma.hbm_to_vmem [thread:$0]  %s2, 2048, %s177, [#allocation8], 128, 128, 8
        $region16: #{tpu_custom_call.1} parent=11 // pred_fallthru
          _
        // Predicated region
        $region17: #{tpu_custom_call.1} parent=11 // pred_check
          %p183 = pneg %p127
        $region18: #{tpu_custom_call.1} parent=11 // pred_check_branch
          %185 = sbr.rel (%p183) target = $region20
        $region19: #{tpu_custom_call.1} parent=11 // pred_region
          _
        $region20: #{tpu_custom_call.1} parent=11 // pred_fallthru
          _
      $region12: #{tpu_custom_call.1} parent=5 // pred_fallthru
        _
      %p186 = scmp.lt.s32.totalorder %s19, 2
      // Predicated region
      $region21: #{tpu_custom_call.1} parent=5 // pred_check
        %p187 = pneg %p186
      $region22: #{tpu_custom_call.1} parent=5 // pred_check_branch
        %189 = sbr.rel (%p187) target = $region24
      $region23: #{tpu_custom_call.1} parent=5 // pred_region
        // Predicated region
        $region25: #{tpu_custom_call.1} parent=23 // pred_check
          %p190 = pneg %p51
        $region26: #{tpu_custom_call.1} parent=23 // pred_check_branch
          %192 = sbr.rel (%p190) target = $region28
        $region27: #{tpu_custom_call.1} parent=23 // pred_region
          %s193 = sand.u32 %s41, 1
          %s194 = scalar_lea.sflag [#allocation5], %s193
          %s195 = sand.u32 %s41, 1
          %s196 = smul.addr %s195, 128
          %s197 = scalar_lea.vmem [#allocation4], %s196
          %s199 = ssub.s32 2048, 2048
          %200 = vsyncadd %s194, %s199
          %s201 = smul.addr %s26, 16
          %s202 = smul.addr %s201, 128
          %s203 = scalar_lea.hbm %s0, %s202
          %s204 = sshll.u32 %s197, 4
          %s205 = int_to_ptr.vmem [resolvable:$true] %s204
          %210 = dma.hbm_to_vmem [thread:$0]  %s203, 2048, %s205, %s194, 128, 128, 8
        $region28: #{tpu_custom_call.1} parent=23 // pred_fallthru
          _
        // Predicated region
        $region29: #{tpu_custom_call.1} parent=23 // pred_check
          %p211 = pneg %p79
        $region30: #{tpu_custom_call.1} parent=23 // pred_check_branch
          %213 = sbr.rel (%p211) target = $region32
        $region31: #{tpu_custom_call.1} parent=23 // pred_region
          %s214 = sand.u32 %s19, 1
          %s215 = scalar_lea.sflag [#allocation8], %s214
          %s216 = sand.u32 %s69, 1
          %s217 = smul.addr %s216, 64
          %s218 = scalar_lea.vmem [#allocation7], %s217
          %s219 = smul.u32 16, %s27
          %s221 = ssub.s32 1024, 1024
          %222 = vsyncadd %s215, %s221
          %s223 = smul.addr %s26, 16
          %s224 = sadd.s32 %s219, %s223
          %s225 = smul.addr %s224, 64
          %s226 = scalar_lea.hbm %s1, %s225
          %s227 = sshll.u32 %s218, 4
          %s228 = int_to_ptr.vmem [resolvable:$true] %s227
          %233 = dma.hbm_to_vmem [thread:$0]  %s226, 1024, %s228, %s215, 64, 64, 4
        $region32: #{tpu_custom_call.1} parent=23 // pred_fallthru
          _
      $region24: #{tpu_custom_call.1} parent=5 // pred_fallthru
        _
      %p234 = scmp.le.s32.totalorder 1, %s19
      %p235 = scmp.lt.s32.totalorder %s19, 3
      %p236 = pnand %p234, %p235
      %p237 = pneg %p236
      // Predicated region
      $region33: #{tpu_custom_call.1} parent=5 // pred_check
        _
      $region34: #{tpu_custom_call.1} parent=5 // pred_check_branch
        %239 = sbr.rel (%p236) target = $region36
      $region35: #{tpu_custom_call.1} parent=5 // pred_region
        %s240 = ssub.s32 %s19, 1
        %s241 = sand.u32 %s44, 1
        %s242 = scalar_lea.sflag [#allocation5], %s241
        %s243 = sand.u32 %s44, 1
        %s244 = smul.addr %s243, 128
        %s245 = scalar_lea.vmem [#allocation4], %s244
        // Predicated region
        $region37: #{tpu_custom_call.1} parent=35 // pred_check
          %p246 = pneg %p57
        $region38: #{tpu_custom_call.1} parent=35 // pred_check_branch
          %248 = sbr.rel (%p246) target = $region40
        $region39: #{tpu_custom_call.1} parent=35 // pred_region
          %249 = dma.done %s242, 2048
        $region40: #{tpu_custom_call.1} parent=35 // pred_fallthru
          _
        %s250 = sand.u32 %s24, 1
        %s251 = scalar_lea.sflag [#allocation8], %s250
        %s252 = sand.u32 %s72, 1
        %s253 = smul.addr %s252, 64
        %s254 = scalar_lea.vmem [#allocation7], %s253
        // Predicated region
        $region41: #{tpu_custom_call.1} parent=35 // pred_check
          %p255 = pneg %p85
        $region42: #{tpu_custom_call.1} parent=35 // pred_check_branch
          %257 = sbr.rel (%p255) target = $region44
        $region43: #{tpu_custom_call.1} parent=35 // pred_region
          %258 = dma.done %s251, 1024
        $region44: #{tpu_custom_call.1} parent=35 // pred_fallthru
          _
        // Predicated region
        $region45: #{tpu_custom_call.1} parent=35 // pred_check
          %p259 = pneg %p106
        $region46: #{tpu_custom_call.1} parent=35 // pred_check_branch
          %261 = sbr.rel (%p259) target = $region48
        $region47: #{tpu_custom_call.1} parent=35 // pred_region
          %262 = dma.done [#allocation8], 2048
        $region48: #{tpu_custom_call.1} parent=35 // pred_fallthru
          _
        %s263 = sand.u32 %s44, 1
        %s264 = scalar_lea.sflag [#allocation5], %s263
        %s265 = sand.u32 %s44, 1
        %s266 = smul.addr %s265, 128
        %s267 = scalar_lea.vmem [#allocation4], %s266
        %p268 = pneg %p57
        %p269 = pneg %p54
        %s270 = sand.u32 %s24, 1
        %s271 = scalar_lea.sflag [#allocation8], %s270
        %s272 = sand.u32 %s72, 1
        %s273 = smul.addr %s272, 64
        %s274 = scalar_lea.vmem [#allocation7], %s273
        %p275 = pneg %p85
        %p276 = pneg %p82
        %p277 = pneg %p106
        %p278 = pneg %p103
        %p279 = pneg %p127
        %p280 = pneg %p124
        %p281 = pneg %p155
        %p282 = pneg %p152
        %s283 = sand.u32 %s142, 1
        %s284 = scalar_lea.sflag [#allocation6], %s283
        %s285 = sand.u32 %s142, 1
        %s286 = smul.addr %s285, 128
        %s287 = scalar_lea.vmem [#allocation10], %s286
        %s288 = smul.u32 16, %s29
        %s289 = smul.u32 16, %s29
        %p291 = scmp.eq.s32.totalorder %s29, 0
        // Predicated region
        $region49: #{tpu_custom_call.1} parent=35 // pred_check
          %p292 = pneg %p291
        $region50: #{tpu_custom_call.1} parent=35 // pred_check_branch
          %294 = sbr.rel (%p292) target = $region52
        $region51: #{tpu_custom_call.1} parent=35 // pred_region
          %v295 = vld [vmem:[%s245] sm:$0xff]
          %v296 = vld [vmem:[%s245 + $0x8] sm:$0xff]
          %v297 = vld [vmem:[%s245 + $0x10] sm:$0xff]
          %v298 = vld [vmem:[%s245 + $0x18] sm:$0xff]
          %v299 = vld [vmem:[%s245 + $0x20] sm:$0xff]
          %v300 = vld [vmem:[%s245 + $0x28] sm:$0xff]
          %v301 = vld [vmem:[%s245 + $0x30] sm:$0xff]
          %v302 = vld [vmem:[%s245 + $0x38] sm:$0xff]
          %v303 = vld [vmem:[%s245 + $0x40] sm:$0xff]
          %v304 = vld [vmem:[%s245 + $0x48] sm:$0xff]
          %v305 = vld [vmem:[%s245 + $0x50] sm:$0xff]
          %v306 = vld [vmem:[%s245 + $0x58] sm:$0xff]
          %v307 = vld [vmem:[%s245 + $0x60] sm:$0xff]
          %v308 = vld [vmem:[%s245 + $0x68] sm:$0xff]
          %v309 = vld [vmem:[%s245 + $0x70] sm:$0xff]
          %v310 = vld [vmem:[%s245 + $0x78] sm:$0xff]
          %v311 = vld [vmem:[#allocation9] sm:$0xff]
          %v312 = vld [vmem:[#allocation9 + $0x8] sm:$0xff]
          %v313 = vld [vmem:[#allocation9 + $0x10] sm:$0xff]
          %v314 = vld [vmem:[#allocation9 + $0x18] sm:$0xff]
          %v315 = vld [vmem:[#allocation9 + $0x20] sm:$0xff]
          %v316 = vld [vmem:[#allocation9 + $0x28] sm:$0xff]
          %v317 = vld [vmem:[#allocation9 + $0x30] sm:$0xff]
          %v318 = vld [vmem:[#allocation9 + $0x38] sm:$0xff]
          %v319 = vld [vmem:[#allocation9 + $0x40] sm:$0xff]
          %v320 = vld [vmem:[#allocation9 + $0x48] sm:$0xff]
          %v321 = vld [vmem:[#allocation9 + $0x50] sm:$0xff]
          %v322 = vld [vmem:[#allocation9 + $0x58] sm:$0xff]
          %v323 = vld [vmem:[#allocation9 + $0x60] sm:$0xff]
          %v324 = vld [vmem:[#allocation9 + $0x68] sm:$0xff]
          %v325 = vld [vmem:[#allocation9 + $0x70] sm:$0xff]
          %v326 = vld [vmem:[#allocation9 + $0x78] sm:$0xff]
          %v327 = vld [vmem:[%s3] sm:$0x1]
          %v329 = vlaneseq
          %v330 = vshrl.u32 %v329, 7
          %v331 = vsub.s32 0, %v330
          %v332 = vrot.slane %v327, %v331
          %334 = vmatprep.subr.mxu0 0.0
          %335 = vmatpush1.msra.mxu0 %v326
          %336 = vmatprep.subr.mxu0 0.0
          %337 = vmatpush1.msra.mxu0 %v325
          %338 = vmatprep.subr.mxu0 0.0
          %339 = vmatpush1.msra.mxu0 %v324
          %340 = vmatprep.subr.mxu0 0.0
          %341 = vmatpush1.msra.mxu0 %v323
          %342 = vmatprep.subr.mxu0 0.0
          %343 = vmatpush1.msra.mxu0 %v322
          %344 = vmatprep.subr.mxu0 0.0
          %345 = vmatpush1.msra.mxu0 %v321
          %346 = vmatprep.subr.mxu0 0.0
          %347 = vmatpush1.msra.mxu0 %v320
          %348 = vmatprep.subr.mxu0 0.0
          %349 = vmatpush1.msra.mxu0 %v319
          %350 = vmatprep.subr.mxu0 0.0
          %351 = vmatpush1.msra.mxu0 %v318
          %352 = vmatprep.subr.mxu0 0.0
          %353 = vmatpush1.msra.mxu0 %v317
          %354 = vmatprep.subr.mxu0 0.0
          %355 = vmatpush1.msra.mxu0 %v316
          %356 = vmatprep.subr.mxu0 0.0
          %357 = vmatpush1.msra.mxu0 %v315
          %358 = vmatprep.subr.mxu0 0.0
          %359 = vmatpush1.msra.mxu0 %v314
          %360 = vmatprep.subr.mxu0 0.0
          %361 = vmatpush1.msra.mxu0 %v313
          %362 = vmatprep.subr.mxu0 0.0
          %363 = vmatpush1.msra.mxu0 %v312
          %364 = vmatprep.subr.mxu0 0.0
          %365 = vmatpush1.msra.mxu0 %v311
          %366 = vmatprep.subr.mxu0 0.0
          %367 = vmatpush2.msra.mxu0 0.0
          %368 = vmatprep.subr.mxu0 0.0
          %369 = vmatpush2.msra.mxu0 0.0
          %370 = vmatprep.subr.mxu0 0.0
          %371 = vmatpush2.msra.mxu0 0.0
          %372 = vmatprep.subr.mxu0 0.0
          %373 = vmatpush2.msra.mxu0 0.0
          %374 = vmatprep.subr.mxu0 0.0
          %375 = vmatpush2.msra.mxu0 0.0
          %376 = vmatprep.subr.mxu0 0.0
          %377 = vmatpush2.msra.mxu0 0.0
          %378 = vmatprep.subr.mxu0 0.0
          %379 = vmatpush2.msra.mxu0 0.0
          %380 = vmatprep.subr.mxu0 0.0
          %381 = vmatpush2.msra.mxu0 0.0
          %382 = vmatprep.subr.mxu0 0.0
          %383 = vmatpush2.msra.mxu0 0.0
          %384 = vmatprep.subr.mxu0 0.0
          %385 = vmatpush2.msra.mxu0 0.0
          %386 = vmatprep.subr.mxu0 0.0
          %387 = vmatpush2.msra.mxu0 0.0
          %388 = vmatprep.subr.mxu0 0.0
          %389 = vmatpush2.msra.mxu0 0.0
          %390 = vmatprep.subr.mxu0 0.0
          %391 = vmatpush2.msra.mxu0 0.0
          %392 = vmatprep.subr.mxu0 0.0
          %393 = vmatpush2.msra.mxu0 0.0
          %394 = vmatprep.subr.mxu0 0.0
          %395 = vmatpush2.msra.mxu0 0.0
          %396 = vmatprep.subr.mxu0 0.0
          %397 = vmatpush2.msra.mxu0 0.0
          %398 = vmatprep.mubr.f32.mxu0 0.0
          %399 = vmatmul.mubr.f32.gmra.mxu0 %v295
          %v400 = vpop.f32.mrf.mxu0
          %v401 = vadd.f32 %v332, %v400
          %v402 = vpop.f32.mrf.mxu0
          %403 = vmatprep.mubr.f32.mxu0 0.0
          %404 = vmatmul.mubr.f32.gmra.mxu0 %v296
          %v405 = vpop.f32.mrf.mxu0
          %v406 = vadd.f32 %v332, %v405
          %v407 = vpop.f32.mrf.mxu0
          %408 = vmatprep.mubr.f32.mxu0 0.0
          %409 = vmatmul.mubr.f32.gmra.mxu0 %v297
          %v410 = vpop.f32.mrf.mxu0
          %v411 = vadd.f32 %v332, %v410
          %v412 = vpop.f32.mrf.mxu0
          %413 = vmatprep.mubr.f32.mxu0 0.0
          %414 = vmatmul.mubr.f32.gmra.mxu0 %v298
          %v415 = vpop.f32.mrf.mxu0
          %v416 = vadd.f32 %v332, %v415
          %v417 = vpop.f32.mrf.mxu0
          %418 = vmatprep.mubr.f32.mxu0 0.0
          %419 = vmatmul.mubr.f32.gmra.mxu0 %v299
          %v420 = vpop.f32.mrf.mxu0
          %v421 = vadd.f32 %v332, %v420
          %v422 = vpop.f32.mrf.mxu0
          %423 = vmatprep.mubr.f32.mxu0 0.0
          %424 = vmatmul.mubr.f32.gmra.mxu0 %v300
          %v425 = vpop.f32.mrf.mxu0
          %v426 = vadd.f32 %v332, %v425
          %v427 = vpop.f32.mrf.mxu0
          %428 = vmatprep.mubr.f32.mxu0 0.0
          %429 = vmatmul.mubr.f32.gmra.mxu0 %v301
          %v430 = vpop.f32.mrf.mxu0
          %v431 = vadd.f32 %v332, %v430
          %v432 = vpop.f32.mrf.mxu0
          %433 = vmatprep.mubr.f32.mxu0 0.0
          %434 = vmatmul.mubr.f32.gmra.mxu0 %v302
          %v435 = vpop.f32.mrf.mxu0
          %v436 = vadd.f32 %v332, %v435
          %v437 = vpop.f32.mrf.mxu0
          %438 = vmatprep.mubr.f32.mxu0 0.0
          %439 = vmatmul.mubr.f32.gmra.mxu0 %v303
          %v440 = vpop.f32.mrf.mxu0
          %v441 = vadd.f32 %v332, %v440
          %v442 = vpop.f32.mrf.mxu0
          %443 = vmatprep.mubr.f32.mxu0 0.0
          %444 = vmatmul.mubr.f32.gmra.mxu0 %v304
          %v445 = vpop.f32.mrf.mxu0
          %v446 = vadd.f32 %v332, %v445
          %v447 = vpop.f32.mrf.mxu0
          %448 = vmatprep.mubr.f32.mxu0 0.0
          %449 = vmatmul.mubr.f32.gmra.mxu0 %v305
          %v450 = vpop.f32.mrf.mxu0
          %v451 = vadd.f32 %v332, %v450
          %v452 = vpop.f32.mrf.mxu0
          %453 = vmatprep.mubr.f32.mxu0 0.0
          %454 = vmatmul.mubr.f32.gmra.mxu0 %v306
          %v455 = vpop.f32.mrf.mxu0
          %v456 = vadd.f32 %v332, %v455
          %v457 = vpop.f32.mrf.mxu0
          %458 = vmatprep.mubr.f32.mxu0 0.0
          %459 = vmatmul.mubr.f32.gmra.mxu0 %v307
          %v460 = vpop.f32.mrf.mxu0
          %v461 = vadd.f32 %v332, %v460
          %v462 = vpop.f32.mrf.mxu0
          %463 = vmatprep.mubr.f32.mxu0 0.0
          %464 = vmatmul.mubr.f32.gmra.mxu0 %v308
          %v465 = vpop.f32.mrf.mxu0
          %v466 = vadd.f32 %v332, %v465
          %v467 = vpop.f32.mrf.mxu0
          %468 = vmatprep.mubr.f32.mxu0 0.0
          %469 = vmatmul.mubr.f32.gmra.mxu0 %v309
          %v470 = vpop.f32.mrf.mxu0
          %v471 = vadd.f32 %v332, %v470
          %v472 = vpop.f32.mrf.mxu0
          %473 = vmatprep.mubr.f32.mxu0 0.0
          %474 = vmatmul.mubr.f32.gmra.mxu0 %v310
          %v475 = vpop.f32.mrf.mxu0
          %v476 = vadd.f32 %v332, %v475
          %v477 = vpop.f32.mrf.mxu0
          %478 = vdwg.mxu0
          %v479 = vmul.f32 %v401, %v401
          %v480 = vmul.f32 %v406, %v406
          %v481 = vmul.f32 %v411, %v411
          %v482 = vmul.f32 %v416, %v416
          %v483 = vmul.f32 %v421, %v421
          %v484 = vmul.f32 %v426, %v426
          %v485 = vmul.f32 %v431, %v431
          %v486 = vmul.f32 %v436, %v436
          %v487 = vmul.f32 %v441, %v441
          %v488 = vmul.f32 %v446, %v446
          %v489 = vmul.f32 %v451, %v451
          %v490 = vmul.f32 %v456, %v456
          %v491 = vmul.f32 %v461, %v461
          %v492 = vmul.f32 %v466, %v466
          %v493 = vmul.f32 %v471, %v471
          %v494 = vmul.f32 %v476, %v476
          %495 = vadd.xlane.f32.xlu0 %v479
          %v496 = vpop.xlane.xlu0 %495
          %497 = vadd.xlane.f32.xlu0 %v480
          %v498 = vpop.xlane.xlu0 %497
          %499 = vadd.xlane.f32.xlu0 %v481
          %v500 = vpop.xlane.xlu0 %499
          %501 = vadd.xlane.f32.xlu0 %v482
          %v502 = vpop.xlane.xlu0 %501
          %503 = vadd.xlane.f32.xlu0 %v483
          %v504 = vpop.xlane.xlu0 %503
          %505 = vadd.xlane.f32.xlu0 %v484
          %v506 = vpop.xlane.xlu0 %505
          %507 = vadd.xlane.f32.xlu0 %v485
          %v508 = vpop.xlane.xlu0 %507
          %509 = vadd.xlane.f32.xlu0 %v486
          %v510 = vpop.xlane.xlu0 %509
          %511 = vadd.xlane.f32.xlu0 %v487
          %v512 = vpop.xlane.xlu0 %511
          %513 = vadd.xlane.f32.xlu0 %v488
          %v514 = vpop.xlane.xlu0 %513
          %515 = vadd.xlane.f32.xlu0 %v489
          %v516 = vpop.xlane.xlu0 %515
          %517 = vadd.xlane.f32.xlu0 %v490
          %v518 = vpop.xlane.xlu0 %517
          %519 = vadd.xlane.f32.xlu0 %v491
          %v520 = vpop.xlane.xlu0 %519
          %521 = vadd.xlane.f32.xlu0 %v492
          %v522 = vpop.xlane.xlu0 %521
          %523 = vadd.xlane.f32.xlu0 %v493
          %v524 = vpop.xlane.xlu0 %523
          %525 = vadd.xlane.f32.xlu0 %v494
          %v526 = vpop.xlane.xlu0 %525
          %v527 = vmax.f32 %v496, 1e-24
          %v528 = vmax.f32 %v498, 1e-24
          %v529 = vmax.f32 %v500, 1e-24
          %v530 = vmax.f32 %v502, 1e-24
          %v531 = vmax.f32 %v504, 1e-24
          %v532 = vmax.f32 %v506, 1e-24
          %v533 = vmax.f32 %v508, 1e-24
          %v534 = vmax.f32 %v510, 1e-24
          %v535 = vmax.f32 %v512, 1e-24
          %v536 = vmax.f32 %v514, 1e-24
          %v537 = vmax.f32 %v516, 1e-24
          %v538 = vmax.f32 %v518, 1e-24
          %v539 = vmax.f32 %v520, 1e-24
          %v540 = vmax.f32 %v522, 1e-24
          %v541 = vmax.f32 %v524, 1e-24
          %v542 = vmax.f32 %v526, 1e-24
          %v543 = vrsqrt.pop %v527
          %v544 = vrsqrt.pop %v528
          %v545 = vrsqrt.pop %v529
          %v546 = vrsqrt.pop %v530
          %v547 = vrsqrt.pop %v531
          %v548 = vrsqrt.pop %v532
          %v549 = vrsqrt.pop %v533
          %v550 = vrsqrt.pop %v534
          %v551 = vrsqrt.pop %v535
          %v552 = vrsqrt.pop %v536
          %v553 = vrsqrt.pop %v537
          %v554 = vrsqrt.pop %v538
          %v555 = vrsqrt.pop %v539
          %v556 = vrsqrt.pop %v540
          %v557 = vrsqrt.pop %v541
          %v558 = vrsqrt.pop %v542
          %v559 = vpack.c.bf16 %v406, %v401
          %v560 = vpack.c.bf16 %v416, %v411
          %v561 = vpack.c.bf16 %v426, %v421
          %v562 = vpack.c.bf16 %v436, %v431
          %v563 = vpack.c.bf16 %v446, %v441
          %v564 = vpack.c.bf16 %v456, %v451
          %v565 = vpack.c.bf16 %v466, %v461
          %v566 = vpack.c.bf16 %v476, %v471
          %v575 = vunpack.c.l.b16 %v559
          %v576 = vunpack.c.h.b16 %v559
          %v577 = vunpack.c.l.b16 %v560
          %v578 = vunpack.c.h.b16 %v560
          %v579 = vunpack.c.l.b16 %v561
          %v580 = vunpack.c.h.b16 %v561
          %v581 = vunpack.c.l.b16 %v562
          %v582 = vunpack.c.h.b16 %v562
          %v583 = vunpack.c.l.b16 %v563
          %v584 = vunpack.c.h.b16 %v563
          %v585 = vunpack.c.l.b16 %v564
          %v586 = vunpack.c.h.b16 %v564
          %v587 = vunpack.c.l.b16 %v565
          %v588 = vunpack.c.h.b16 %v565
          %v589 = vunpack.c.l.b16 %v566
          %v590 = vunpack.c.h.b16 %v566
          %v591 = vpack.c.b16 %v575, %v575
          %v592 = vpack.c.b16 %v576, %v576
          %v593 = vpack.c.b16 %v577, %v577
          %v594 = vpack.c.b16 %v578, %v578
          %v595 = vpack.c.b16 %v579, %v579
          %v596 = vpack.c.b16 %v580, %v580
          %v597 = vpack.c.b16 %v581, %v581
          %v598 = vpack.c.b16 %v582, %v582
          %v599 = vpack.c.b16 %v583, %v583
          %v600 = vpack.c.b16 %v584, %v584
          %v601 = vpack.c.b16 %v585, %v585
          %v602 = vpack.c.b16 %v586, %v586
          %v603 = vpack.c.b16 %v587, %v587
          %v604 = vpack.c.b16 %v588, %v588
          %v605 = vpack.c.b16 %v589, %v589
          %v606 = vpack.c.b16 %v590, %v590
          %623 = vst [vmem:[#allocation2] sm:$0xf] %v591
          %624 = vst [vmem:[#allocation2 + $0x4] sm:$0xf] %v592
          %625 = vst [vmem:[#allocation2 + $0x8] sm:$0xf] %v593
          %626 = vst [vmem:[#allocation2 + $0xc] sm:$0xf] %v594
          %627 = vst [vmem:[#allocation2 + $0x10] sm:$0xf] %v595
          %628 = vst [vmem:[#allocation2 + $0x14] sm:$0xf] %v596
          %629 = vst [vmem:[#allocation2 + $0x18] sm:$0xf] %v597
          %630 = vst [vmem:[#allocation2 + $0x1c] sm:$0xf] %v598
          %631 = vst [vmem:[#allocation2 + $0x20] sm:$0xf] %v599
          %632 = vst [vmem:[#allocation2 + $0x24] sm:$0xf] %v600
          %633 = vst [vmem:[#allocation2 + $0x28] sm:$0xf] %v601
          %634 = vst [vmem:[#allocation2 + $0x2c] sm:$0xf] %v602
          %635 = vst [vmem:[#allocation2 + $0x30] sm:$0xf] %v603
          %636 = vst [vmem:[#allocation2 + $0x34] sm:$0xf] %v604
          %637 = vst [vmem:[#allocation2 + $0x38] sm:$0xf] %v605
          %638 = vst [vmem:[#allocation2 + $0x3c] sm:$0xf] %v606
          %v639 = vmul.f32 %v401, %v543
          %v640 = vmul.f32 %v406, %v544
          %v641 = vmul.f32 %v411, %v545
          %v642 = vmul.f32 %v416, %v546
          %v643 = vmul.f32 %v421, %v547
          %v644 = vmul.f32 %v426, %v548
          %v645 = vmul.f32 %v431, %v549
          %v646 = vmul.f32 %v436, %v550
          %v647 = vmul.f32 %v441, %v551
          %v648 = vmul.f32 %v446, %v552
          %v649 = vmul.f32 %v451, %v553
          %v650 = vmul.f32 %v456, %v554
          %v651 = vmul.f32 %v461, %v555
          %v652 = vmul.f32 %v466, %v556
          %v653 = vmul.f32 %v471, %v557
          %v654 = vmul.f32 %v476, %v558
          %v655 = vpack.c.bf16 %v640, %v639
          %v656 = vpack.c.bf16 %v642, %v641
          %v657 = vpack.c.bf16 %v644, %v643
          %v658 = vpack.c.bf16 %v646, %v645
          %v659 = vpack.c.bf16 %v648, %v647
          %v660 = vpack.c.bf16 %v650, %v649
          %v661 = vpack.c.bf16 %v652, %v651
          %v662 = vpack.c.bf16 %v654, %v653
          %v671 = vunpack.c.l.b16 %v655
          %v672 = vunpack.c.h.b16 %v655
          %v673 = vunpack.c.l.b16 %v656
          %v674 = vunpack.c.h.b16 %v656
          %v675 = vunpack.c.l.b16 %v657
          %v676 = vunpack.c.h.b16 %v657
          %v677 = vunpack.c.l.b16 %v658
          %v678 = vunpack.c.h.b16 %v658
          %v679 = vunpack.c.l.b16 %v659
          %v680 = vunpack.c.h.b16 %v659
          %v681 = vunpack.c.l.b16 %v660
          %v682 = vunpack.c.h.b16 %v660
          %v683 = vunpack.c.l.b16 %v661
          %v684 = vunpack.c.h.b16 %v661
          %v685 = vunpack.c.l.b16 %v662
          %v686 = vunpack.c.h.b16 %v662
          %v687 = vpack.c.b16 %v671, %v671
          %v688 = vpack.c.b16 %v672, %v672
          %v689 = vpack.c.b16 %v673, %v673
          %v690 = vpack.c.b16 %v674, %v674
          %v691 = vpack.c.b16 %v675, %v675
          %v692 = vpack.c.b16 %v676, %v676
          %v693 = vpack.c.b16 %v677, %v677
          %v694 = vpack.c.b16 %v678, %v678
          %v695 = vpack.c.b16 %v679, %v679
          %v696 = vpack.c.b16 %v680, %v680
          %v697 = vpack.c.b16 %v681, %v681
          %v698 = vpack.c.b16 %v682, %v682
          %v699 = vpack.c.b16 %v683, %v683
          %v700 = vpack.c.b16 %v684, %v684
          %v701 = vpack.c.b16 %v685, %v685
          %v702 = vpack.c.b16 %v686, %v686
          %719 = vst [vmem:[#allocation3] sm:$0xf] %v687
          %720 = vst [vmem:[#allocation3 + $0x4] sm:$0xf] %v688
          %721 = vst [vmem:[#allocation3 + $0x8] sm:$0xf] %v689
          %722 = vst [vmem:[#allocation3 + $0xc] sm:$0xf] %v690
          %723 = vst [vmem:[#allocation3 + $0x10] sm:$0xf] %v691
          %724 = vst [vmem:[#allocation3 + $0x14] sm:$0xf] %v692
          %725 = vst [vmem:[#allocation3 + $0x18] sm:$0xf] %v693
          %726 = vst [vmem:[#allocation3 + $0x1c] sm:$0xf] %v694
          %727 = vst [vmem:[#allocation3 + $0x20] sm:$0xf] %v695
          %728 = vst [vmem:[#allocation3 + $0x24] sm:$0xf] %v696
          %729 = vst [vmem:[#allocation3 + $0x28] sm:$0xf] %v697
          %730 = vst [vmem:[#allocation3 + $0x2c] sm:$0xf] %v698
          %731 = vst [vmem:[#allocation3 + $0x30] sm:$0xf] %v699
          %732 = vst [vmem:[#allocation3 + $0x34] sm:$0xf] %v700
          %733 = vst [vmem:[#allocation3 + $0x38] sm:$0xf] %v701
          %734 = vst [vmem:[#allocation3 + $0x3c] sm:$0xf] %v702
        $region52: #{tpu_custom_call.1} parent=35 // pred_fallthru
          _
        %s735 = smul.u32 %s29, 128
        %s736 = sshra.s32 %s735, 3
        %s737 = sand.u32 %s735, 7
        %s738 = smul.addr %s736, 4
        %s739 = scalar_lea.vmem [#allocation3], %s738
        %v740 = vld [vmem:[%s739] sm:$0xf]
        %v741 = vld [vmem:[%s739 + $0x4] sm:$0xf]
        %v742 = vld [vmem:[%s739 + $0x8] sm:$0xf]
        %v743 = vld [vmem:[%s739 + $0xc] sm:$0xf]
        %v744 = vld [vmem:[%s739 + $0x10] sm:$0xf]
        %v745 = vld [vmem:[%s739 + $0x14] sm:$0xf]
        %v746 = vld [vmem:[%s739 + $0x18] sm:$0xf]
        %v747 = vld [vmem:[%s739 + $0x1c] sm:$0xf]
        %v748 = vld [vmem:[%s739 + $0x20] sm:$0xf]
        %v749 = vld [vmem:[%s739 + $0x24] sm:$0xf]
        %v750 = vld [vmem:[%s739 + $0x28] sm:$0xf]
        %v751 = vld [vmem:[%s739 + $0x2c] sm:$0xf]
        %v752 = vld [vmem:[%s739 + $0x30] sm:$0xf]
        %v753 = vld [vmem:[%s739 + $0x34] sm:$0xf]
        %v754 = vld [vmem:[%s739 + $0x38] sm:$0xf]
        %v755 = vld [vmem:[%s739 + $0x3c] sm:$0xf]
        %v756 = vld [vmem:[#allocation3] sm:$0xf]
        %v757 = vld [vmem:[#allocation3 + $0x4] sm:$0xf]
        %v758 = vld [vmem:[#allocation3 + $0x8] sm:$0xf]
        %v759 = vld [vmem:[#allocation3 + $0xc] sm:$0xf]
        %v760 = vld [vmem:[#allocation3 + $0x10] sm:$0xf]
        %v761 = vld [vmem:[#allocation3 + $0x14] sm:$0xf]
        %v762 = vld [vmem:[#allocation3 + $0x18] sm:$0xf]
        %v763 = vld [vmem:[#allocation3 + $0x1c] sm:$0xf]
        %v764 = vld [vmem:[#allocation3 + $0x20] sm:$0xf]
        %v765 = vld [vmem:[#allocation3 + $0x24] sm:$0xf]
        %v766 = vld [vmem:[#allocation3 + $0x28] sm:$0xf]
        %v767 = vld [vmem:[#allocation3 + $0x2c] sm:$0xf]
        %v768 = vld [vmem:[#allocation3 + $0x30] sm:$0xf]
        %v769 = vld [vmem:[#allocation3 + $0x34] sm:$0xf]
        %v770 = vld [vmem:[#allocation3 + $0x38] sm:$0xf]
        %v771 = vld [vmem:[#allocation3 + $0x3c] sm:$0xf]
        %v788 = vunpack.c.l.b16 %v740
        %v789 = vunpack.c.l.b16 %v741
        %v790 = vunpack.c.l.b16 %v742
        %v791 = vunpack.c.l.b16 %v743
        %v792 = vunpack.c.l.b16 %v744
        %v793 = vunpack.c.l.b16 %v745
        %v794 = vunpack.c.l.b16 %v746
        %v795 = vunpack.c.l.b16 %v747
        %v796 = vunpack.c.l.b16 %v748
        %v797 = vunpack.c.l.b16 %v749
        %v798 = vunpack.c.l.b16 %v750
        %v799 = vunpack.c.l.b16 %v751
        %v800 = vunpack.c.l.b16 %v752
        %v801 = vunpack.c.l.b16 %v753
        %v802 = vunpack.c.l.b16 %v754
        %v803 = vunpack.c.l.b16 %v755
        %v804 = vpack.c.b16 %v789, %v788
        %v805 = vpack.c.b16 %v791, %v790
        %v806 = vpack.c.b16 %v793, %v792
        %v807 = vpack.c.b16 %v795, %v794
        %v808 = vpack.c.b16 %v797, %v796
        %v809 = vpack.c.b16 %v799, %v798
        %v810 = vpack.c.b16 %v801, %v800
        %v811 = vpack.c.b16 %v803, %v802
        %v836 = vunpack.c.l.b16 %v756
        %v837 = vunpack.c.l.b16 %v757
        %v838 = vunpack.c.l.b16 %v758
        %v839 = vunpack.c.l.b16 %v759
        %v840 = vunpack.c.l.b16 %v760
        %v841 = vunpack.c.l.b16 %v761
        %v842 = vunpack.c.l.b16 %v762
        %v843 = vunpack.c.l.b16 %v763
        %v844 = vunpack.c.l.b16 %v764
        %v845 = vunpack.c.l.b16 %v765
        %v846 = vunpack.c.l.b16 %v766
        %v847 = vunpack.c.l.b16 %v767
        %v848 = vunpack.c.l.b16 %v768
        %v849 = vunpack.c.l.b16 %v769
        %v850 = vunpack.c.l.b16 %v770
        %v851 = vunpack.c.l.b16 %v771
        %v852 = vpack.c.b16 %v837, %v836
        %v853 = vpack.c.b16 %v839, %v838
        %v854 = vpack.c.b16 %v841, %v840
        %v855 = vpack.c.b16 %v843, %v842
        %v856 = vpack.c.b16 %v845, %v844
        %v857 = vpack.c.b16 %v847, %v846
        %v858 = vpack.c.b16 %v849, %v848
        %v859 = vpack.c.b16 %v851, %v850
        %868 = vmatprep.subr.bf16.mxu0 0
        %869 = vmatpush1.bf16.xpose.msra.mxu0 %v859
        %870 = vmatprep.subr.bf16.mxu0 0
        %871 = vmatpush1.bf16.xpose.msra.mxu0 %v858
        %872 = vmatprep.subr.bf16.mxu0 0
        %873 = vmatpush1.bf16.xpose.msra.mxu0 %v857
        %874 = vmatprep.subr.bf16.mxu0 0
        %875 = vmatpush1.bf16.xpose.msra.mxu0 %v856
        %876 = vmatprep.subr.bf16.mxu0 0
        %877 = vmatpush1.bf16.xpose.msra.mxu0 %v855
        %878 = vmatprep.subr.bf16.mxu0 0
        %879 = vmatpush1.bf16.xpose.msra.mxu0 %v854
        %880 = vmatprep.subr.bf16.mxu0 0
        %881 = vmatpush1.bf16.xpose.msra.mxu0 %v853
        %882 = vmatprep.subr.bf16.mxu0 0
        %883 = vmatpush1.bf16.xpose.msra.mxu0 %v852
        %884 = vmatprep.subr.bf16.mxu0 0
        %885 = vmatpush2.bf16.xpose.msra.mxu0 0
        %886 = vmatprep.subr.bf16.mxu0 0
        %887 = vmatpush2.bf16.xpose.msra.mxu0 0
        %888 = vmatprep.subr.bf16.mxu0 0
        %889 = vmatpush2.bf16.xpose.msra.mxu0 0
        %890 = vmatprep.subr.bf16.mxu0 0
        %891 = vmatpush2.bf16.xpose.msra.mxu0 0
        %892 = vmatprep.subr.bf16.mxu0 0
        %893 = vmatpush2.bf16.xpose.msra.mxu0 0
        %894 = vmatprep.subr.bf16.mxu0 0
        %895 = vmatpush2.bf16.xpose.msra.mxu0 0
        %896 = vmatprep.subr.bf16.mxu0 0
        %897 = vmatpush2.bf16.xpose.msra.mxu0 0
        %898 = vmatprep.subr.bf16.mxu0 0
        %899 = vmatpush2.bf16.xpose.msra.mxu0 0
        %900 = vmatprep.mubr.bf16.mxu0 0
        %901 = vmatmul.mubr.bf16.gmra.mxu0 %v804
        %v902 = vpop.f32.mrf.mxu0
        %v903 = vadd.f32 0.0, %v902
        %v904 = vpop.f32.mrf.mxu0
        %v905 = vpop.f32.mrf.mxu0
        %v906 = vadd.f32 0.0, %v905
        %v907 = vpop.f32.mrf.mxu0
        %908 = vmatprep.mubr.bf16.mxu0 0
        %909 = vmatmul.mubr.bf16.gmra.mxu0 %v805
        %v910 = vpop.f32.mrf.mxu0
        %v911 = vadd.f32 0.0, %v910
        %v912 = vpop.f32.mrf.mxu0
        %v913 = vpop.f32.mrf.mxu0
        %v914 = vadd.f32 0.0, %v913
        %v915 = vpop.f32.mrf.mxu0
        %916 = vmatprep.mubr.bf16.mxu0 0
        %917 = vmatmul.mubr.bf16.gmra.mxu0 %v806
        %v918 = vpop.f32.mrf.mxu0
        %v919 = vadd.f32 0.0, %v918
        %v920 = vpop.f32.mrf.mxu0
        %v921 = vpop.f32.mrf.mxu0
        %v922 = vadd.f32 0.0, %v921
        %v923 = vpop.f32.mrf.mxu0
        %924 = vmatprep.mubr.bf16.mxu0 0
        %925 = vmatmul.mubr.bf16.gmra.mxu0 %v807
        %v926 = vpop.f32.mrf.mxu0
        %v927 = vadd.f32 0.0, %v926
        %v928 = vpop.f32.mrf.mxu0
        %v929 = vpop.f32.mrf.mxu0
        %v930 = vadd.f32 0.0, %v929
        %v931 = vpop.f32.mrf.mxu0
        %932 = vmatprep.mubr.bf16.mxu0 0
        %933 = vmatmul.mubr.bf16.gmra.mxu0 %v808
        %v934 = vpop.f32.mrf.mxu0
        %v935 = vadd.f32 0.0, %v934
        %v936 = vpop.f32.mrf.mxu0
        %v937 = vpop.f32.mrf.mxu0
        %v938 = vadd.f32 0.0, %v937
        %v939 = vpop.f32.mrf.mxu0
        %940 = vmatprep.mubr.bf16.mxu0 0
        %941 = vmatmul.mubr.bf16.gmra.mxu0 %v809
        %v942 = vpop.f32.mrf.mxu0
        %v943 = vadd.f32 0.0, %v942
        %v944 = vpop.f32.mrf.mxu0
        %v945 = vpop.f32.mrf.mxu0
        %v946 = vadd.f32 0.0, %v945
        %v947 = vpop.f32.mrf.mxu0
        %948 = vmatprep.mubr.bf16.mxu0 0
        %949 = vmatmul.mubr.bf16.gmra.mxu0 %v810
        %v950 = vpop.f32.mrf.mxu0
        %v951 = vadd.f32 0.0, %v950
        %v952 = vpop.f32.mrf.mxu0
        %v953 = vpop.f32.mrf.mxu0
        %v954 = vadd.f32 0.0, %v953
        %v955 = vpop.f32.mrf.mxu0
        %956 = vmatprep.mubr.bf16.mxu0 0
        %957 = vmatmul.mubr.bf16.gmra.mxu0 %v811
        %v958 = vpop.f32.mrf.mxu0
        %v959 = vadd.f32 0.0, %v958
        %v960 = vpop.f32.mrf.mxu0
        %v961 = vpop.f32.mrf.mxu0
        %v962 = vadd.f32 0.0, %v961
        %v963 = vpop.f32.mrf.mxu0
        %964 = vdwg.mxu0
        %v965 = vld [vmem:[%s254] sm:$0xf]
        %v966 = vld [vmem:[%s254 + $0x4] sm:$0xf]
        %v967 = vld [vmem:[%s254 + $0x8] sm:$0xf]
        %v968 = vld [vmem:[%s254 + $0xc] sm:$0xf]
        %v969 = vld [vmem:[%s254 + $0x10] sm:$0xf]
        %v970 = vld [vmem:[%s254 + $0x14] sm:$0xf]
        %v971 = vld [vmem:[%s254 + $0x18] sm:$0xf]
        %v972 = vld [vmem:[%s254 + $0x1c] sm:$0xf]
        %v973 = vld [vmem:[%s254 + $0x20] sm:$0xf]
        %v974 = vld [vmem:[%s254 + $0x24] sm:$0xf]
        %v975 = vld [vmem:[%s254 + $0x28] sm:$0xf]
        %v976 = vld [vmem:[%s254 + $0x2c] sm:$0xf]
        %v977 = vld [vmem:[%s254 + $0x30] sm:$0xf]
        %v978 = vld [vmem:[%s254 + $0x34] sm:$0xf]
        %v979 = vld [vmem:[%s254 + $0x38] sm:$0xf]
        %v980 = vld [vmem:[%s254 + $0x3c] sm:$0xf]
        %v981 = vunpack.c.l.bf16 %v965
        %v982 = vunpack.c.l.bf16 %v966
        %v983 = vunpack.c.l.bf16 %v967
        %v984 = vunpack.c.l.bf16 %v968
        %v985 = vunpack.c.l.bf16 %v969
        %v986 = vunpack.c.l.bf16 %v970
        %v987 = vunpack.c.l.bf16 %v971
        %v988 = vunpack.c.l.bf16 %v972
        %v989 = vunpack.c.l.bf16 %v973
        %v990 = vunpack.c.l.bf16 %v974
        %v991 = vunpack.c.l.bf16 %v975
        %v992 = vunpack.c.l.bf16 %v976
        %v993 = vunpack.c.l.bf16 %v977
        %v994 = vunpack.c.l.bf16 %v978
        %v995 = vunpack.c.l.bf16 %v979
        %v996 = vunpack.c.l.bf16 %v980
        %v997 = vmul.f32 %v981, %v903
        %v998 = vmul.f32 %v982, %v906
        %v999 = vmul.f32 %v983, %v911
        %v1000 = vmul.f32 %v984, %v914
        %v1001 = vmul.f32 %v985, %v919
        %v1002 = vmul.f32 %v986, %v922
        %v1003 = vmul.f32 %v987, %v927
        %v1004 = vmul.f32 %v988, %v930
        %v1005 = vmul.f32 %v989, %v935
        %v1006 = vmul.f32 %v990, %v938
        %v1007 = vmul.f32 %v991, %v943
        %v1008 = vmul.f32 %v992, %v946
        %v1009 = vmul.f32 %v993, %v951
        %v1010 = vmul.f32 %v994, %v954
        %v1011 = vmul.f32 %v995, %v959
        %v1012 = vmul.f32 %v996, %v962
        %v1013 = vpack.c.bf16 %v998, %v997
        %v1014 = vpack.c.bf16 %v1000, %v999
        %v1015 = vpack.c.bf16 %v1002, %v1001
        %v1016 = vpack.c.bf16 %v1004, %v1003
        %v1017 = vpack.c.bf16 %v1006, %v1005
        %v1018 = vpack.c.bf16 %v1008, %v1007
        %v1019 = vpack.c.bf16 %v1010, %v1009
        %v1020 = vpack.c.bf16 %v1012, %v1011
        %v1021 = vld [vmem:[#allocation2] sm:$0xf]
        %v1022 = vld [vmem:[#allocation2 + $0x4] sm:$0xf]
        %v1023 = vld [vmem:[#allocation2 + $0x8] sm:$0xf]
        %v1024 = vld [vmem:[#allocation2 + $0xc] sm:$0xf]
        %v1025 = vld [vmem:[#allocation2 + $0x10] sm:$0xf]
        %v1026 = vld [vmem:[#allocation2 + $0x14] sm:$0xf]
        %v1027 = vld [vmem:[#allocation2 + $0x18] sm:$0xf]
        %v1028 = vld [vmem:[#allocation2 + $0x1c] sm:$0xf]
        %v1029 = vld [vmem:[#allocation2 + $0x20] sm:$0xf]
        %v1030 = vld [vmem:[#allocation2 + $0x24] sm:$0xf]
        %v1031 = vld [vmem:[#allocation2 + $0x28] sm:$0xf]
        %v1032 = vld [vmem:[#allocation2 + $0x2c] sm:$0xf]
        %v1033 = vld [vmem:[#allocation2 + $0x30] sm:$0xf]
        %v1034 = vld [vmem:[#allocation2 + $0x34] sm:$0xf]
        %v1035 = vld [vmem:[#allocation2 + $0x38] sm:$0xf]
        %v1036 = vld [vmem:[#allocation2 + $0x3c] sm:$0xf]
        %v1053 = vunpack.c.l.b16 %v1021
        %v1054 = vunpack.c.l.b16 %v1022
        %v1055 = vunpack.c.l.b16 %v1023
        %v1056 = vunpack.c.l.b16 %v1024
        %v1057 = vunpack.c.l.b16 %v1025
        %v1058 = vunpack.c.l.b16 %v1026
        %v1059 = vunpack.c.l.b16 %v1027
        %v1060 = vunpack.c.l.b16 %v1028
        %v1061 = vunpack.c.l.b16 %v1029
        %v1062 = vunpack.c.l.b16 %v1030
        %v1063 = vunpack.c.l.b16 %v1031
        %v1064 = vunpack.c.l.b16 %v1032
        %v1065 = vunpack.c.l.b16 %v1033
        %v1066 = vunpack.c.l.b16 %v1034
        %v1067 = vunpack.c.l.b16 %v1035
        %v1068 = vunpack.c.l.b16 %v1036
        %v1069 = vpack.c.b16 %v1054, %v1053
        %v1070 = vpack.c.b16 %v1056, %v1055
        %v1071 = vpack.c.b16 %v1058, %v1057
        %v1072 = vpack.c.b16 %v1060, %v1059
        %v1073 = vpack.c.b16 %v1062, %v1061
        %v1074 = vpack.c.b16 %v1064, %v1063
        %v1075 = vpack.c.b16 %v1066, %v1065
        %v1076 = vpack.c.b16 %v1068, %v1067
        %1085 = vmatprep.subr.bf16.mxu0 0
        %1086 = vmatpush1.bf16.msra.mxu0 %v1076
        %1087 = vmatprep.subr.bf16.mxu0 0
        %1088 = vmatpush1.bf16.msra.mxu0 %v1075
        %1089 = vmatprep.subr.bf16.mxu0 0
        %1090 = vmatpush1.bf16.msra.mxu0 %v1074
        %1091 = vmatprep.subr.bf16.mxu0 0
        %1092 = vmatpush1.bf16.msra.mxu0 %v1073
        %1093 = vmatprep.subr.bf16.mxu0 0
        %1094 = vmatpush1.bf16.msra.mxu0 %v1072
        %1095 = vmatprep.subr.bf16.mxu0 0
        %1096 = vmatpush1.bf16.msra.mxu0 %v1071
        %1097 = vmatprep.subr.bf16.mxu0 0
        %1098 = vmatpush1.bf16.msra.mxu0 %v1070
        %1099 = vmatprep.subr.bf16.mxu0 0
        %1100 = vmatpush1.bf16.msra.mxu0 %v1069
        %1101 = vmatprep.subr.bf16.mxu0 0
        %1102 = vmatpush2.bf16.msra.mxu0 0
        %1103 = vmatprep.subr.bf16.mxu0 0
        %1104 = vmatpush2.bf16.msra.mxu0 0
        %1105 = vmatprep.subr.bf16.mxu0 0
        %1106 = vmatpush2.bf16.msra.mxu0 0
        %1107 = vmatprep.subr.bf16.mxu0 0
        %1108 = vmatpush2.bf16.msra.mxu0 0
        %1109 = vmatprep.subr.bf16.mxu0 0
        %1110 = vmatpush2.bf16.msra.mxu0 0
        %1111 = vmatprep.subr.bf16.mxu0 0
        %1112 = vmatpush2.bf16.msra.mxu0 0
        %1113 = vmatprep.subr.bf16.mxu0 0
        %1114 = vmatpush2.bf16.msra.mxu0 0
        %1115 = vmatprep.subr.bf16.mxu0 0
        %1116 = vmatpush2.bf16.msra.mxu0 0
        %1117 = vmatprep.mubr.bf16.mxu0 0
        %1118 = vmatmul.mubr.bf16.gmra.mxu0 %v1013
        %v1119 = vpop.f32.mrf.mxu0
        %v1120 = vadd.f32 0.0, %v1119
        %v1121 = vpop.f32.mrf.mxu0
        %v1122 = vpop.f32.mrf.mxu0
        %v1123 = vadd.f32 0.0, %v1122
        %v1124 = vpop.f32.mrf.mxu0
        %1125 = vmatprep.mubr.bf16.mxu0 0
        %1126 = vmatmul.mubr.bf16.gmra.mxu0 %v1014
        %v1127 = vpop.f32.mrf.mxu0
        %v1128 = vadd.f32 0.0, %v1127
        %v1129 = vpop.f32.mrf.mxu0
        %v1130 = vpop.f32.mrf.mxu0
        %v1131 = vadd.f32 0.0, %v1130
        %v1132 = vpop.f32.mrf.mxu0
        %1133 = vmatprep.mubr.bf16.mxu0 0
        %1134 = vmatmul.mubr.bf16.gmra.mxu0 %v1015
        %v1135 = vpop.f32.mrf.mxu0
        %v1136 = vadd.f32 0.0, %v1135
        %v1137 = vpop.f32.mrf.mxu0
        %v1138 = vpop.f32.mrf.mxu0
        %v1139 = vadd.f32 0.0, %v1138
        %v1140 = vpop.f32.mrf.mxu0
        %1141 = vmatprep.mubr.bf16.mxu0 0
        %1142 = vmatmul.mubr.bf16.gmra.mxu0 %v1016
        %v1143 = vpop.f32.mrf.mxu0
        %v1144 = vadd.f32 0.0, %v1143
        %v1145 = vpop.f32.mrf.mxu0
        %v1146 = vpop.f32.mrf.mxu0
        %v1147 = vadd.f32 0.0, %v1146
        %v1148 = vpop.f32.mrf.mxu0
        %1149 = vmatprep.mubr.bf16.mxu0 0
        %1150 = vmatmul.mubr.bf16.gmra.mxu0 %v1017
        %v1151 = vpop.f32.mrf.mxu0
        %v1152 = vadd.f32 0.0, %v1151
        %v1153 = vpop.f32.mrf.mxu0
        %v1154 = vpop.f32.mrf.mxu0
        %v1155 = vadd.f32 0.0, %v1154
        %v1156 = vpop.f32.mrf.mxu0
        %1157 = vmatprep.mubr.bf16.mxu0 0
        %1158 = vmatmul.mubr.bf16.gmra.mxu0 %v1018
        %v1159 = vpop.f32.mrf.mxu0
        %v1160 = vadd.f32 0.0, %v1159
        %v1161 = vpop.f32.mrf.mxu0
        %v1162 = vpop.f32.mrf.mxu0
        %v1163 = vadd.f32 0.0, %v1162
        %v1164 = vpop.f32.mrf.mxu0
        %1165 = vmatprep.mubr.bf16.mxu0 0
        %1166 = vmatmul.mubr.bf16.gmra.mxu0 %v1019
        %v1167 = vpop.f32.mrf.mxu0
        %v1168 = vadd.f32 0.0, %v1167
        %v1169 = vpop.f32.mrf.mxu0
        %v1170 = vpop.f32.mrf.mxu0
        %v1171 = vadd.f32 0.0, %v1170
        %v1172 = vpop.f32.mrf.mxu0
        %1173 = vmatprep.mubr.bf16.mxu0 0
        %1174 = vmatmul.mubr.bf16.gmra.mxu0 %v1020
        %v1175 = vpop.f32.mrf.mxu0
        %v1176 = vadd.f32 0.0, %v1175
        %v1177 = vpop.f32.mrf.mxu0
        %v1178 = vpop.f32.mrf.mxu0
        %v1179 = vadd.f32 0.0, %v1178
        %v1180 = vpop.f32.mrf.mxu0
        %1181 = vdwg.mxu0
        %v1182 = vmax.f32 %v1120, 0.0
        %v1183 = vmax.f32 %v1123, 0.0
        %v1184 = vmax.f32 %v1128, 0.0
        %v1185 = vmax.f32 %v1131, 0.0
        %v1186 = vmax.f32 %v1136, 0.0
        %v1187 = vmax.f32 %v1139, 0.0
        %v1188 = vmax.f32 %v1144, 0.0
        %v1189 = vmax.f32 %v1147, 0.0
        %v1190 = vmax.f32 %v1152, 0.0
        %v1191 = vmax.f32 %v1155, 0.0
        %v1192 = vmax.f32 %v1160, 0.0
        %v1193 = vmax.f32 %v1163, 0.0
        %v1194 = vmax.f32 %v1168, 0.0
        %v1195 = vmax.f32 %v1171, 0.0
        %v1196 = vmax.f32 %v1176, 0.0
        %v1197 = vmax.f32 %v1179, 0.0
        %1198 = vst [vmem:[%s287] sm:$0xff] %v1182
        %1199 = vst [vmem:[%s287 + $0x8] sm:$0xff] %v1183
        %1200 = vst [vmem:[%s287 + $0x10] sm:$0xff] %v1184
        %1201 = vst [vmem:[%s287 + $0x18] sm:$0xff] %v1185
        %1202 = vst [vmem:[%s287 + $0x20] sm:$0xff] %v1186
        %1203 = vst [vmem:[%s287 + $0x28] sm:$0xff] %v1187
        %1204 = vst [vmem:[%s287 + $0x30] sm:$0xff] %v1188
        %1205 = vst [vmem:[%s287 + $0x38] sm:$0xff] %v1189
        %1206 = vst [vmem:[%s287 + $0x40] sm:$0xff] %v1190
        %1207 = vst [vmem:[%s287 + $0x48] sm:$0xff] %v1191
        %1208 = vst [vmem:[%s287 + $0x50] sm:$0xff] %v1192
        %1209 = vst [vmem:[%s287 + $0x58] sm:$0xff] %v1193
        %1210 = vst [vmem:[%s287 + $0x60] sm:$0xff] %v1194
        %1211 = vst [vmem:[%s287 + $0x68] sm:$0xff] %v1195
        %1212 = vst [vmem:[%s287 + $0x70] sm:$0xff] %v1196
        %1213 = vst [vmem:[%s287 + $0x78] sm:$0xff] %v1197
        %s1214 = sand.u32 %s142, 1
        %s1215 = scalar_lea.sflag [#allocation6], %s1214
        %s1216 = sand.u32 %s142, 1
        %s1217 = smul.addr %s1216, 128
        %s1218 = scalar_lea.vmem [#allocation10], %s1217
        // Predicated region
        $region53: #{tpu_custom_call.1} parent=35 // pred_check
          %p1219 = pneg %p152
        $region54: #{tpu_custom_call.1} parent=35 // pred_check_branch
          %1221 = sbr.rel (%p1219) target = $region56
        $region55: #{tpu_custom_call.1} parent=35 // pred_region
          %s1222 = smul.u32 16, %s29
          %s1224 = ssub.s32 2048, 2048
          %1225 = vsyncadd %s1215, %s1224
          %s1226 = smul.addr %s28, 16
          %s1227 = sadd.s32 %s1222, %s1226
          %s1228 = smul.addr %s1227, 128
          %s1229 = scalar_lea.hbm %s4, %s1228
          %s1230 = sshll.u32 %s1218, 4
          %s1231 = int_to_ptr.vmem [resolvable:$true] %s1230
          %1236 = dma.vmem_to_hbm [thread:$0]  %s1231, 2048, %s1229, %s1215, 128, 128, 8
        $region56: #{tpu_custom_call.1} parent=35 // pred_fallthru
          _
      $region36: #{tpu_custom_call.1} parent=5 // pred_fallthru
        _
      %p1237 = scmp.le.s32.totalorder 2, %s19
      // Predicated region
      $region57: #{tpu_custom_call.1} parent=5 // pred_check
        %p1238 = pneg %p1237
      $region58: #{tpu_custom_call.1} parent=5 // pred_check_branch
        %1240 = sbr.rel (%p1238) target = $region60
      $region59: #{tpu_custom_call.1} parent=5 // pred_region
        %s1241 = ssub.s32 %s19, 2
        // Predicated region
        $region61: #{tpu_custom_call.1} parent=59 // pred_check
          %p1242 = pneg %p158
        $region62: #{tpu_custom_call.1} parent=59 // pred_check_branch
          %1244 = sbr.rel (%p1242) target = $region64
        $region63: #{tpu_custom_call.1} parent=59 // pred_region
          %s1245 = sand.u32 %s143, 1
          %s1246 = scalar_lea.sflag [#allocation6], %s1245
          %s1247 = sand.u32 %s143, 1
          %s1248 = smul.addr %s1247, 128
          %s1249 = scalar_lea.vmem [#allocation10], %s1248
          %1250 = dma.done %s1246, 2048
        $region64: #{tpu_custom_call.1} parent=59 // pred_fallthru
          _
      $region60: #{tpu_custom_call.1} parent=5 // pred_fallthru
        _
    $region6: #{tpu_custom_call.1} parent=1 // loop_footer
      %s23 = sadd.s32 1, %s19
    $region7: #{tpu_custom_call.1} parent=1 // loop_footer_branch
      %18 = sbr.rel target = $region3
    $region8: #{tpu_custom_call.1} parent=1 // loop_exit
      _
    %1251 = vsyncpa [#allocation5], 1
    %s1252 = scalar_lea.sflag [#allocation5], 1
    %1253 = vsyncpa %s1252, 1
    %1254 = vsyncpa [#allocation8], 1
    %s1255 = scalar_lea.sflag [#allocation8], 1
    %1256 = vsyncpa %s1255, 1
    %1257 = vsyncpa [#allocation6], 1
    %s1258 = scalar_lea.sflag [#allocation6], 1
    %1259 = vsyncpa %s1258, 1

</llo_original>
